<compile_context>
chip_gen: v6e
topology: v6e:2x2x1
jax: 0.10.0
libtpu: 0.0.40
codegen_flags: <defaults>
</compile_context>

<pallas_src>
import functools

import jax
import jax.numpy as jnp
from jax import lax
from jax.experimental import pallas as pl
from jax.experimental.pallas import tpu as pltpu

_LANE = 128
_VMEM_LIMIT = 32 * 1024 * 1024          # fits v5e/v6e (128 MiB) and v7x (64 MiB)
_FAST_PATH_MAX_N = 1024                 # single-call fused path while A fits in VMEM
_RESIDENT_X_BYTES = 2 * 1024 * 1024     # keep X / (H@W2) VMEM-resident up to this


def _round_up(x, m):
    return (x + m - 1) // m * m


def _pad2(a, rows, cols):
    return jnp.pad(a, ((0, rows - a.shape[0]), (0, cols - a.shape[1])))


def _plan(n):
    """Return (n_pad, tile). tile=None selects the fused small-N fast path."""
    if n <= _FAST_PATH_MAX_N:
        return _round_up(n, _LANE), None
    if n >= 8192:
        tile = 2048
    elif n >= 2048:
        tile = 1024
    else:
        tile = 512
    return _round_up(n, tile), tile


# ----------------------------- kernels ------------------------------------- #


def _fused_small_kernel(d_ref, a_ref, xs_ref, w1_ref, b1_ref, w2_ref, b2_ref,
                        o_ref):
    """Whole forward pass with A (int8) resident in VMEM; A is read once."""
    a = a_ref[...].astype(xs_ref.dtype)          # int8 -> bf16, reused by both layers
    d = d_ref[...]                               # (n,1) f32 row scale
    # Layer 1: A_hat @ X @ W1  (X already column-scaled by d in the wrapper)
    agg1 = jnp.dot(a, xs_ref[...], preferred_element_type=jnp.float32) * d
    h1 = jnp.maximum(
        jnp.dot(agg1.astype(w1_ref.dtype), w1_ref[...],
                preferred_element_type=jnp.float32) + b1_ref[...], 0.0)
    # Layer 2: A_hat @ (relu(H1) @ W2) + b2, column scale folded into the operand.
    y = jnp.dot((h1 * d).astype(w2_ref.dtype), w2_ref[...],
                preferred_element_type=jnp.float32).astype(xs_ref.dtype)
    agg2 = jnp.dot(a, y, preferred_element_type=jnp.float32) * d
    o_ref[...] = agg2 + b2_ref[...]


def _layer1_kernel(d_ref, a_ref, xs_ref, w1_ref, b1_ref, w2_ref, y_ref,
                   acc_ref, *, tk, x_full):
    """acc_k += A[i,k] @ Xs[k]; last-K epilogue emits (d * relu((acc*d)@W1+b1)) @ W2."""
    k = pl.program_id(1)

    @pl.when(k == 0)
    def _():
        acc_ref[...] = jnp.zeros_like(acc_ref)

    if x_full:
        off = pl.multiple_of(k * tk, tk)
        x_tile = xs_ref[pl.ds(off, tk), :]       # Xs is VMEM-resident; slice window
    else:
        x_tile = xs_ref[...]
    acc_ref[...] += jnp.dot(a_ref[...].astype(x_tile.dtype), x_tile,
                            preferred_element_type=jnp.float32)

    @pl.when(k == pl.num_programs(1) - 1)
    def _():
        d = d_ref[...]
        agg = acc_ref[...] * d                   # (A_hat @ X) row tile, f32
        h1 = jnp.maximum(
            jnp.dot(agg.astype(w1_ref.dtype), w1_ref[...],
                    preferred_element_type=jnp.float32) + b1_ref[...], 0.0)
        # Pre-scaled, pre-projected operand for layer 2's aggregation.
        y = jnp.dot((h1 * d).astype(w2_ref.dtype), w2_ref[...],
                    preferred_element_type=jnp.float32)
        y_ref[...] = y.astype(y_ref.dtype)


def _layer2_kernel(d_ref, a_ref, y_ref, b2_ref, o_ref, acc_ref, *, tk, x_full):
    """acc_k += A[i,k] @ Y[k]; epilogue: out = acc * d + b2 (Y already col-scaled)."""
    k = pl.program_id(1)

    @pl.when(k == 0)
    def _():
        acc_ref[...] = jnp.zeros_like(acc_ref)

    if x_full:
        off = pl.multiple_of(k * tk, tk)
        y_tile = y_ref[pl.ds(off, tk), :]
    else:
        y_tile = y_ref[...]
    acc_ref[...] += jnp.dot(a_ref[...].astype(y_tile.dtype), y_tile,
                            preferred_element_type=jnp.float32)

    @pl.when(k == pl.num_programs(1) - 1)
    def _():
        o_ref[...] = acc_ref[...] * d_ref[...] + b2_ref[...]


# ----------------------------- wrappers ------------------------------------ #


def _fused_small(d_p, adj_p, xs_p, w1_p, b1_p, w2_p, b2_p):
    n_pad = adj_p.shape[0]
    f_out = w2_p.shape[1]
    return pl.pallas_call(
        _fused_small_kernel,
        out_shape=jax.ShapeDtypeStruct((n_pad, f_out), jnp.float32),
        compiler_params=pltpu.CompilerParams(vmem_limit_bytes=_VMEM_LIMIT),
    )(d_p, adj_p, xs_p, w1_p, b1_p, w2_p, b2_p)


def _layer1(adj_p, d_p, xs_p, w1_p, b1_p, w2_p, *, tm, tk, x_full):
    n_pad = adj_p.shape[0]
    f_in = xs_p.shape[1]
    f_mid = w1_p.shape[1]
    f_out = w2_p.shape[1]
    grid = (n_pad // tm, n_pad // tk)

    x_spec = (pl.BlockSpec((n_pad, f_in), lambda i, k: (0, 0)) if x_full
              else pl.BlockSpec((tk, f_in), lambda i, k: (k, 0)))
    kernel = functools.partial(_layer1_kernel, tk=tk, x_full=x_full)

    return pl.pallas_call(
        kernel,
        out_shape=jax.ShapeDtypeStruct((n_pad, f_out), jnp.bfloat16),
        grid=grid,
        in_specs=[
            pl.BlockSpec((tm, 1), lambda i, k: (i, 0)),        # d^{-1/2} rows
            pl.BlockSpec((tm, tk), lambda i, k: (i, k)),       # A tile (int8 stream)
            x_spec,                                            # pre-scaled X
            pl.BlockSpec((f_in, f_mid), lambda i, k: (0, 0)),  # W1
            pl.BlockSpec((1, f_mid), lambda i, k: (0, 0)),     # b1
            pl.BlockSpec((f_mid, f_out), lambda i, k: (0, 0)), # W2
        ],
        out_specs=pl.BlockSpec((tm, f_out), lambda i, k: (i, 0)),
        scratch_shapes=[pltpu.VMEM((tm, f_in), jnp.float32)],
        compiler_params=pltpu.CompilerParams(
            dimension_semantics=("parallel", "arbitrary"),
            vmem_limit_bytes=_VMEM_LIMIT),
    )(d_p, adj_p, xs_p, w1_p, b1_p, w2_p)


def _layer2(adj_p, d_p, y_p, b2_p, *, tm, tk, x_full):
    n_pad = adj_p.shape[0]
    f_out = y_p.shape[1]
    grid = (n_pad // tm, n_pad // tk)

    y_spec = (pl.BlockSpec((n_pad, f_out), lambda i, k: (0, 0)) if x_full
              else pl.BlockSpec((tk, f_out), lambda i, k: (k, 0)))
    kernel = functools.partial(_layer2_kernel, tk=tk, x_full=x_full)

    return pl.pallas_call(
        kernel,
        out_shape=jax.ShapeDtypeStruct((n_pad, f_out), jnp.float32),
        grid=grid,
        in_specs=[
            pl.BlockSpec((tm, 1), lambda i, k: (i, 0)),        # d^{-1/2} rows
            pl.BlockSpec((tm, tk), lambda i, k: (i, k)),       # A tile (int8 stream)
            y_spec,                                            # (d*relu(H1)) @ W2
            pl.BlockSpec((1, f_out), lambda i, k: (0, 0)),     # b2
        ],
        out_specs=pl.BlockSpec((tm, f_out), lambda i, k: (i, 0)),
        scratch_shapes=[pltpu.VMEM((tm, f_out), jnp.float32)],
        compiler_params=pltpu.CompilerParams(
            dimension_semantics=("parallel", "arbitrary"),
            vmem_limit_bytes=_VMEM_LIMIT),
    )(d_p, adj_p, y_p, b2_p)


def gcn_forward(adj, x, params, *, compute_dtype=jnp.bfloat16):
    """relu(GraphConv1(A, X)) -> GraphConv2, DGL 'both' normalization."""
    w1, b1, w2, b2 = params
    n, f_in = x.shape
    hidden = w1.shape[1]
    num_classes = w2.shape[1]

    n_pad, tile = _plan(n)
    f_in_pad = _round_up(f_in, _LANE)
    f_mid_pad = _round_up(hidden, _LANE)
    f_out_pad = _round_up(num_classes, _LANE)

    # A streams as int8 (exact 0/1 values): half the bf16 HBM traffic on the
    # dominant N^2 read; upcast to bf16 happens in-kernel right before the MXU.
    adj_p = _pad2(adj, n_pad, n_pad).astype(jnp.int8)

    # Degrees from the narrow int8 copy (f32 accumulation) instead of an extra
    # full f32 pass over the original adjacency.
    deg = jnp.sum(adj_p, axis=1, dtype=jnp.float32)
    d_inv_sqrt = jnp.where(deg > 0, lax.rsqrt(deg), 0.0)          # (n_pad,)
    d_p = d_inv_sqrt[:, None]                                     # (n_pad, 1) f32

    # Column normalization pre-folded into X once -> the hot K loop is a raw dot.
    xs_p = _pad2(x * d_inv_sqrt[:n, None], n_pad, f_in_pad).astype(compute_dtype)

    w1_p = _pad2(w1, f_in_pad, f_mid_pad).astype(compute_dtype)
    b1_p = _pad2(b1.reshape(1, -1), 1, f_mid_pad).astype(jnp.float32)
    w2_p = _pad2(w2, f_mid_pad, f_out_pad).astype(compute_dtype)
    b2_p = _pad2(b2.reshape(1, -1), 1, f_out_pad).astype(jnp.float32)

    if tile is None:
        out = _fused_small(d_p, adj_p, xs_p, w1_p, b1_p, w2_p, b2_p)
    else:
        width = max(f_in_pad, f_out_pad)
        x_full = n_pad * width * 2 <= _RESIDENT_X_BYTES
        y = _layer1(adj_p, d_p, xs_p, w1_p, b1_p, w2_p,
                    tm=tile, tk=tile, x_full=x_full)
        out = _layer2(adj_p, d_p, y, b2_p, tm=tile, tk=tile, x_full=x_full)
    return out[:n, :num_classes]


def glorot(key, shape):
    fan_in, fan_out = shape
    limit = jnp.sqrt(6.0 / (fan_in + fan_out))
    return jax.random.uniform(key, shape, jnp.float32, -limit, limit)


if __name__ == "__main__":
    IN_FEATS, HIDDEN, NUM_CLASSES = 16, 32, 8

    def make_problem(key, n):
        k_adj, k_x, k_w1, k_b1, k_w2, k_b2 = jax.random.split(key, 6)
        rand = jax.random.uniform(k_adj, (n, n))
        adj = (rand + rand.T > 1.2).astype(jnp.float32)
        adj = jnp.maximum(adj, jnp.eye(n, dtype=jnp.float32))   # self-loops
        x = jax.random.normal(k_x, (n, IN_FEATS), jnp.float32)
        w1 = glorot(k_w1, (IN_FEATS, HIDDEN))
        b1 = 0.1 * jax.random.normal(k_b1, (1, HIDDEN), jnp.float32)
        w2 = glorot(k_w2, (HIDDEN, NUM_CLASSES))
        b2 = 0.1 * jax.random.normal(k_b2, (1, NUM_CLASSES), jnp.float32)
        return adj, x, (w1, b1, w2, b2)

    def reference(adj, x, params):
        w1, b1, w2, b2 = params
        deg = jnp.sum(adj, axis=1)
        dis = 1.0 / jnp.sqrt(deg)
        a_hat = adj * dis[:, None] * dis[None, :]
        h = jnp.maximum(
            jnp.dot(jnp.dot(a_hat, x, precision="highest"), w1,
                    precision="highest") + b1, 0.0)
        return jnp.dot(jnp.dot(a_hat, h, precision="highest"), w2,
                       precision="highest") + b2

    gcn = jax.jit(gcn_forward)
    key = jax.random.PRNGKey(0)
    k_small, k_big = jax.random.split(key)

    # Small graph (N=200): exercises the fused single-call fast path.
    adj, x, params = make_problem(k_small, 200)
    out = jax.block_until_ready(gcn(adj, x, params))
    ref = reference(adj, x, params)
    assert out.shape == (200, NUM_CLASSES)
    err = jnp.max(jnp.abs(out - ref))
    assert jnp.allclose(out, ref, atol=2e-2, rtol=2e-2), err

    # Larger graph (N=1300): exercises the tiled streaming path (tile=512, 3x3 grid).
    adj, x, params = make_problem(k_big, 1300)
    out = jax.block_until_ready(gcn(adj, x, params))
    ref = reference(adj, x, params)
    assert out.shape == (1300, NUM_CLASSES)
    err = jnp.max(jnp.abs(out - ref))
    assert jnp.allclose(out, ref, atol=3e-2, rtol=3e-2), err

    print("KERNEL_OK")
</pallas_src>

<mosaic_0001>
module attributes {stable_mosaic.version = 11 : i64} {
  func.func @_fused_small_kernel(%arg0: memref<256x1xf32, #tpu.memory_space<vmem>>, %arg1: memref<256x256xi8, #tpu.memory_space<vmem>>, %arg2: memref<256x128xbf16, #tpu.memory_space<vmem>>, %arg3: memref<128x128xbf16, #tpu.memory_space<vmem>>, %arg4: memref<1x128xf32, #tpu.memory_space<vmem>>, %arg5: memref<128x128xbf16, #tpu.memory_space<vmem>>, %arg6: memref<1x128xf32, #tpu.memory_space<vmem>>, %arg7: memref<256x128xf32, #tpu.memory_space<vmem>>) attributes {dimension_semantics = [], scalar_prefetch = 0 : i64, scratch_operands = 0 : i64, tpu.core_type = #tpu.core_type<tc>} {
    %c0 = arith.constant 0 : index
    %c0_0 = arith.constant 0 : index
    %0 = vector.load %arg1[%c0, %c0_0] : memref<256x256xi8, #tpu.memory_space<vmem>>, vector<256x256xi8>
    %1 = arith.sitofp %0 : vector<256x256xi8> to vector<256x256xbf16>
    %c0_1 = arith.constant 0 : index
    %c0_2 = arith.constant 0 : index
    %2 = vector.load %arg0[%c0_1, %c0_2] : memref<256x1xf32, #tpu.memory_space<vmem>>, vector<256x1xf32>
    %c0_3 = arith.constant 0 : index
    %c0_4 = arith.constant 0 : index
    %3 = vector.load %arg2[%c0_3, %c0_4] : memref<256x128xbf16, #tpu.memory_space<vmem>>, vector<256x128xbf16>
    %cst = arith.constant dense<0.000000e+00> : vector<256x128xf32>
    %4 = tpu.matmul %1, %3, %cst {dimension_numbers = #tpu.dot_dimension_numbers<[1], [0], [0], [1], [0, 0, 1, 1], [], []>} : vector<256x256xbf16>, vector<256x128xbf16>, vector<256x128xf32> -> vector<256x128xf32>
    %5 = vector.broadcast %2 : vector<256x1xf32> to vector<256x128xf32>
    %6 = arith.mulf %4, %5 : vector<256x128xf32>
    %7 = arith.truncf %6 : vector<256x128xf32> to vector<256x128xbf16>
    %c0_5 = arith.constant 0 : index
    %c0_6 = arith.constant 0 : index
    %8 = vector.load %arg3[%c0_5, %c0_6] : memref<128x128xbf16, #tpu.memory_space<vmem>>, vector<128x128xbf16>
    %cst_7 = arith.constant dense<0.000000e+00> : vector<256x128xf32>
    %9 = tpu.matmul %7, %8, %cst_7 {dimension_numbers = #tpu.dot_dimension_numbers<[1], [0], [0], [1], [0, 0, 1, 1], [], []>} : vector<256x128xbf16>, vector<128x128xbf16>, vector<256x128xf32> -> vector<256x128xf32>
    %c0_8 = arith.constant 0 : index
    %c0_9 = arith.constant 0 : index
    %10 = vector.load %arg4[%c0_8, %c0_9] : memref<1x128xf32, #tpu.memory_space<vmem>>, vector<1x128xf32>
    %11 = vector.broadcast %10 : vector<1x128xf32> to vector<256x128xf32>
    %12 = arith.addf %9, %11 : vector<256x128xf32>
    %cst_10 = arith.constant 0.000000e+00 : f32
    %13 = vector.broadcast %cst_10 : f32 to vector<256x128xf32>
    %14 = arith.maximumf %12, %13 : vector<256x128xf32>
    %15 = vector.broadcast %2 : vector<256x1xf32> to vector<256x128xf32>
    %16 = arith.mulf %14, %15 : vector<256x128xf32>
    %17 = arith.truncf %16 : vector<256x128xf32> to vector<256x128xbf16>
    %c0_11 = arith.constant 0 : index
    %c0_12 = arith.constant 0 : index
    %18 = vector.load %arg5[%c0_11, %c0_12] : memref<128x128xbf16, #tpu.memory_space<vmem>>, vector<128x128xbf16>
    %cst_13 = arith.constant dense<0.000000e+00> : vector<256x128xf32>
    %19 = tpu.matmul %17, %18, %cst_13 {dimension_numbers = #tpu.dot_dimension_numbers<[1], [0], [0], [1], [0, 0, 1, 1], [], []>} : vector<256x128xbf16>, vector<128x128xbf16>, vector<256x128xf32> -> vector<256x128xf32>
    %20 = arith.truncf %19 : vector<256x128xf32> to vector<256x128xbf16>
    %cst_14 = arith.constant dense<0.000000e+00> : vector<256x128xf32>
    %21 = tpu.matmul %1, %20, %cst_14 {dimension_numbers = #tpu.dot_dimension_numbers<[1], [0], [0], [1], [0, 0, 1, 1], [], []>} : vector<256x256xbf16>, vector<256x128xbf16>, vector<256x128xf32> -> vector<256x128xf32>
    %22 = vector.broadcast %2 : vector<256x1xf32> to vector<256x128xf32>
    %23 = arith.mulf %21, %22 : vector<256x128xf32>
    %c0_15 = arith.constant 0 : index
    %c0_16 = arith.constant 0 : index
    %24 = vector.load %arg6[%c0_15, %c0_16] : memref<1x128xf32, #tpu.memory_space<vmem>>, vector<1x128xf32>
    %25 = vector.broadcast %24 : vector<1x128xf32> to vector<256x128xf32>
    %26 = arith.addf %23, %25 : vector<256x128xf32>
    %c0_17 = arith.constant 0 : index
    %c0_18 = arith.constant 0 : index
    %27 = vector.load %arg7[%c0_17, %c0_18] : memref<256x128xf32, #tpu.memory_space<vmem>>, vector<256x128xf32>
    tpu.vector_store %arg7[%c0_17, %c0_18], %26 {strides = array<i32>} : memref<256x128xf32, #tpu.memory_space<vmem>>, vector<256x128xf32>,
    return
  }
}

</mosaic_0001>

<llo_original>
// kernel: gcn_forward.1
$region0: #{gcn_forward.1}
  #allocation0 [shape = 'u32[]', space=smem, size = 0x4, offset = 0x4, fixed_abs, tag = 'smem constant byte address 0x4 - core index']
  #allocation1 [shape = 'u32[144,128]{1,0:T(1,128)}', space=vmem, size = 0x12000, scoped, tag = 'internal scratch']
  %s0 = inlined_call_operand.vmem [shape: f32[256,1], index: 0, kind: input, shape index: {}]
  %s1 = inlined_call_operand.vmem [shape: s8[256,256], index: 1, kind: input, shape index: {}]
  %s2 = inlined_call_operand.vmem [shape: bf16[256,128], index: 2, kind: input, shape index: {}]
  %s3 = inlined_call_operand.vmem [shape: bf16[128,128], index: 3, kind: input, shape index: {}]
  %s4 = inlined_call_operand.vmem [shape: f32[1,128], index: 4, kind: input, shape index: {}]
  %s5 = inlined_call_operand.vmem [shape: bf16[128,128], index: 5, kind: input, shape index: {}]
  %s6 = inlined_call_operand.vmem [shape: f32[1,128], index: 6, kind: input, shape index: {}]
  %s7 = inlined_call_operand.vmem [shape: f32[256,128], index: 7, kind: output, shape index: {}]
  %s8 = sld [smem:[#allocation0]]
  $region38: #{gcn_forward.1} parent=0
    _
  %s10 = ssub.s32 1, %s8
  %s11 = scalar_select 0, %s10, %s8
  // Predicated region
  $region2: #{gcn_forward.1} parent=0 // pred_check
    _
  $region3: #{gcn_forward.1} parent=0 // pred_check_branch
    %13 = sbr.rel (0) target = $region5
  $region4: #{gcn_forward.1} parent=0 // pred_region
    _
  $region5: #{gcn_forward.1} parent=0 // pred_fallthru
    _
  // Predicated region
  $region6: #{gcn_forward.1} parent=0 // pred_check
    _
  $region7: #{gcn_forward.1} parent=0 // pred_check_branch
    %15 = sbr.rel (0) target = $region9
  $region8: #{gcn_forward.1} parent=0 // pred_region
    _
  $region9: #{gcn_forward.1} parent=0 // pred_fallthru
    _
  // Predicated region
  $region10: #{gcn_forward.1} parent=0 // pred_check
    _
  $region11: #{gcn_forward.1} parent=0 // pred_check_branch
    %17 = sbr.rel (0) target = $region13
  $region12: #{gcn_forward.1} parent=0 // pred_region
    _
  $region13: #{gcn_forward.1} parent=0 // pred_fallthru
    _
  // Predicated region
  $region14: #{gcn_forward.1} parent=0 // pred_check
    _
  $region15: #{gcn_forward.1} parent=0 // pred_check_branch
    %19 = sbr.rel (0) target = $region17
  $region16: #{gcn_forward.1} parent=0 // pred_region
    _
  $region17: #{gcn_forward.1} parent=0 // pred_fallthru
    _
  // Predicated region
  $region18: #{gcn_forward.1} parent=0 // pred_check
    _
  $region19: #{gcn_forward.1} parent=0 // pred_check_branch
    %21 = sbr.rel (0) target = $region21
  $region20: #{gcn_forward.1} parent=0 // pred_region
    _
  $region21: #{gcn_forward.1} parent=0 // pred_fallthru
    _
  // Predicated region
  $region22: #{gcn_forward.1} parent=0 // pred_check
    _
  $region23: #{gcn_forward.1} parent=0 // pred_check_branch
    %23 = sbr.rel (0) target = $region25
  $region24: #{gcn_forward.1} parent=0 // pred_region
    _
  $region25: #{gcn_forward.1} parent=0 // pred_fallthru
    _
  // Predicated region
  $region26: #{gcn_forward.1} parent=0 // pred_check
    _
  $region27: #{gcn_forward.1} parent=0 // pred_check_branch
    %25 = sbr.rel (0) target = $region29
  $region28: #{gcn_forward.1} parent=0 // pred_region
    _
  $region29: #{gcn_forward.1} parent=0 // pred_fallthru
    _
  %v27 = vld [vmem:[%s1] sm:$0xff]
  %v28 = vld [vmem:[%s1 + $0x8] sm:$0xff]
  %v29 = vld [vmem:[%s1 + $0x10] sm:$0xff]
  %v30 = vld [vmem:[%s1 + $0x18] sm:$0xff]
  %v31 = vld [vmem:[%s1 + $0x20] sm:$0xff]
  %v32 = vld [vmem:[%s1 + $0x28] sm:$0xff]
  %v33 = vld [vmem:[%s1 + $0x30] sm:$0xff]
  %v34 = vld [vmem:[%s1 + $0x38] sm:$0xff]
  %v35 = vld [vmem:[%s1 + $0x40] sm:$0xff]
  %v36 = vld [vmem:[%s1 + $0x48] sm:$0xff]
  %v37 = vld [vmem:[%s1 + $0x50] sm:$0xff]
  %v38 = vld [vmem:[%s1 + $0x58] sm:$0xff]
  %v39 = vld [vmem:[%s1 + $0x60] sm:$0xff]
  %v40 = vld [vmem:[%s1 + $0x68] sm:$0xff]
  %v41 = vld [vmem:[%s1 + $0x70] sm:$0xff]
  %v42 = vld [vmem:[%s1 + $0x78] sm:$0xff]
  %v43 = vunpack.c.l.s8.bf16 %v27
  %v44 = vunpack.c.l.s8.bf16 %v28
  %v45 = vunpack.c.h.s8.bf16 %v27
  %v46 = vunpack.c.h.s8.bf16 %v28
  %v47 = vunpack.c.l.s8.bf16 %v29
  %v48 = vunpack.c.l.s8.bf16 %v30
  %v49 = vunpack.c.h.s8.bf16 %v29
  %v50 = vunpack.c.h.s8.bf16 %v30
  %v51 = vunpack.c.l.s8.bf16 %v31
  %v52 = vunpack.c.l.s8.bf16 %v32
  %v53 = vunpack.c.h.s8.bf16 %v31
  %v54 = vunpack.c.h.s8.bf16 %v32
  %v55 = vunpack.c.l.s8.bf16 %v33
  %v56 = vunpack.c.l.s8.bf16 %v34
  %v57 = vunpack.c.h.s8.bf16 %v33
  %v58 = vunpack.c.h.s8.bf16 %v34
  %v59 = vunpack.c.l.s8.bf16 %v35
  %v60 = vunpack.c.l.s8.bf16 %v36
  %v61 = vunpack.c.h.s8.bf16 %v35
  %v62 = vunpack.c.h.s8.bf16 %v36
  %v63 = vunpack.c.l.s8.bf16 %v37
  %v64 = vunpack.c.l.s8.bf16 %v38
  %v65 = vunpack.c.h.s8.bf16 %v37
  %v66 = vunpack.c.h.s8.bf16 %v38
  %v67 = vunpack.c.l.s8.bf16 %v39
  %v68 = vunpack.c.l.s8.bf16 %v40
  %v69 = vunpack.c.h.s8.bf16 %v39
  %v70 = vunpack.c.h.s8.bf16 %v40
  %v71 = vunpack.c.l.s8.bf16 %v41
  %v72 = vunpack.c.l.s8.bf16 %v42
  %v73 = vunpack.c.h.s8.bf16 %v41
  %v74 = vunpack.c.h.s8.bf16 %v42
  %v75 = vld [vmem:[%s0] sm:$0xff]
  %v76 = vld [vmem:[%s0 + $0x8] sm:$0xff]
  %v77 = vld [vmem:[%s0 + $0x10] sm:$0xff]
  %v78 = vld [vmem:[%s0 + $0x18] sm:$0xff]
  %v79 = vld [vmem:[%s0 + $0x20] sm:$0xff]
  %v80 = vld [vmem:[%s0 + $0x28] sm:$0xff]
  %v81 = vld [vmem:[%s0 + $0x30] sm:$0xff]
  %v82 = vld [vmem:[%s0 + $0x38] sm:$0xff]
  %v83 = vld [vmem:[%s0 + $0x40] sm:$0xff]
  %v84 = vld [vmem:[%s0 + $0x48] sm:$0xff]
  %v85 = vld [vmem:[%s0 + $0x50] sm:$0xff]
  %v86 = vld [vmem:[%s0 + $0x58] sm:$0xff]
  %v87 = vld [vmem:[%s0 + $0x60] sm:$0xff]
  %v88 = vld [vmem:[%s0 + $0x68] sm:$0xff]
  %v89 = vld [vmem:[%s0 + $0x70] sm:$0xff]
  %v90 = vld [vmem:[%s0 + $0x78] sm:$0xff]
  %v91 = vld [vmem:[%s0 + $0x80] sm:$0xff]
  %v92 = vld [vmem:[%s0 + $0x88] sm:$0xff]
  %v93 = vld [vmem:[%s0 + $0x90] sm:$0xff]
  %v94 = vld [vmem:[%s0 + $0x98] sm:$0xff]
  %v95 = vld [vmem:[%s0 + $0xa0] sm:$0xff]
  %v96 = vld [vmem:[%s0 + $0xa8] sm:$0xff]
  %v97 = vld [vmem:[%s0 + $0xb0] sm:$0xff]
  %v98 = vld [vmem:[%s0 + $0xb8] sm:$0xff]
  %v99 = vld [vmem:[%s0 + $0xc0] sm:$0xff]
  %v100 = vld [vmem:[%s0 + $0xc8] sm:$0xff]
  %v101 = vld [vmem:[%s0 + $0xd0] sm:$0xff]
  %v102 = vld [vmem:[%s0 + $0xd8] sm:$0xff]
  %v103 = vld [vmem:[%s0 + $0xe0] sm:$0xff]
  %v104 = vld [vmem:[%s0 + $0xe8] sm:$0xff]
  %v105 = vld [vmem:[%s0 + $0xf0] sm:$0xff]
  %v106 = vld [vmem:[%s0 + $0xf8] sm:$0xff]
  %v107 = vld [vmem:[%s2] sm:$0xf]
  %v108 = vld [vmem:[%s2 + $0x4] sm:$0xf]
  %v109 = vld [vmem:[%s2 + $0x8] sm:$0xf]
  %v110 = vld [vmem:[%s2 + $0xc] sm:$0xf]
  %v111 = vld [vmem:[%s2 + $0x10] sm:$0xf]
  %v112 = vld [vmem:[%s2 + $0x14] sm:$0xf]
  %v113 = vld [vmem:[%s2 + $0x18] sm:$0xf]
  %v114 = vld [vmem:[%s2 + $0x1c] sm:$0xf]
  %v115 = vld [vmem:[%s2 + $0x20] sm:$0xf]
  %v116 = vld [vmem:[%s2 + $0x24] sm:$0xf]
  %v117 = vld [vmem:[%s2 + $0x28] sm:$0xf]
  %v118 = vld [vmem:[%s2 + $0x2c] sm:$0xf]
  %v119 = vld [vmem:[%s2 + $0x30] sm:$0xf]
  %v120 = vld [vmem:[%s2 + $0x34] sm:$0xf]
  %v121 = vld [vmem:[%s2 + $0x38] sm:$0xf]
  %v122 = vld [vmem:[%s2 + $0x3c] sm:$0xf]
  %v123 = vld [vmem:[%s2 + $0x40] sm:$0xf]
  %v124 = vld [vmem:[%s2 + $0x44] sm:$0xf]
  %v125 = vld [vmem:[%s2 + $0x48] sm:$0xf]
  %v126 = vld [vmem:[%s2 + $0x4c] sm:$0xf]
  %v127 = vld [vmem:[%s2 + $0x50] sm:$0xf]
  %v128 = vld [vmem:[%s2 + $0x54] sm:$0xf]
  %v129 = vld [vmem:[%s2 + $0x58] sm:$0xf]
  %v130 = vld [vmem:[%s2 + $0x5c] sm:$0xf]
  %v131 = vld [vmem:[%s2 + $0x60] sm:$0xf]
  %v132 = vld [vmem:[%s2 + $0x64] sm:$0xf]
  %v133 = vld [vmem:[%s2 + $0x68] sm:$0xf]
  %v134 = vld [vmem:[%s2 + $0x6c] sm:$0xf]
  %v135 = vld [vmem:[%s2 + $0x70] sm:$0xf]
  %v136 = vld [vmem:[%s2 + $0x74] sm:$0xf]
  %v137 = vld [vmem:[%s2 + $0x78] sm:$0xf]
  %v138 = vld [vmem:[%s2 + $0x7c] sm:$0xf]
  %v171 = vunpack.c.l.b16 %v107
  %v172 = vunpack.c.l.b16 %v108
  %v173 = vunpack.c.l.b16 %v109
  %v174 = vunpack.c.l.b16 %v110
  %v175 = vunpack.c.l.b16 %v111
  %v176 = vunpack.c.l.b16 %v112
  %v177 = vunpack.c.l.b16 %v113
  %v178 = vunpack.c.l.b16 %v114
  %v179 = vunpack.c.l.b16 %v115
  %v180 = vunpack.c.l.b16 %v116
  %v181 = vunpack.c.l.b16 %v117
  %v182 = vunpack.c.l.b16 %v118
  %v183 = vunpack.c.l.b16 %v119
  %v184 = vunpack.c.l.b16 %v120
  %v185 = vunpack.c.l.b16 %v121
  %v186 = vunpack.c.l.b16 %v122
  %v187 = vunpack.c.l.b16 %v123
  %v188 = vunpack.c.l.b16 %v124
  %v189 = vunpack.c.l.b16 %v125
  %v190 = vunpack.c.l.b16 %v126
  %v191 = vunpack.c.l.b16 %v127
  %v192 = vunpack.c.l.b16 %v128
  %v193 = vunpack.c.l.b16 %v129
  %v194 = vunpack.c.l.b16 %v130
  %v195 = vunpack.c.l.b16 %v131
  %v196 = vunpack.c.l.b16 %v132
  %v197 = vunpack.c.l.b16 %v133
  %v198 = vunpack.c.l.b16 %v134
  %v199 = vunpack.c.l.b16 %v135
  %v200 = vunpack.c.l.b16 %v136
  %v201 = vunpack.c.l.b16 %v137
  %v202 = vunpack.c.l.b16 %v138
  %v203 = vpack.c.b16 %v172, %v171
  %v204 = vpack.c.b16 %v174, %v173
  %v205 = vpack.c.b16 %v176, %v175
  %v206 = vpack.c.b16 %v178, %v177
  %v207 = vpack.c.b16 %v180, %v179
  %v208 = vpack.c.b16 %v182, %v181
  %v209 = vpack.c.b16 %v184, %v183
  %v210 = vpack.c.b16 %v186, %v185
  %v211 = vpack.c.b16 %v188, %v187
  %v212 = vpack.c.b16 %v190, %v189
  %v213 = vpack.c.b16 %v192, %v191
  %v214 = vpack.c.b16 %v194, %v193
  %v215 = vpack.c.b16 %v196, %v195
  %v216 = vpack.c.b16 %v198, %v197
  %v217 = vpack.c.b16 %v200, %v199
  %v218 = vpack.c.b16 %v202, %v201
  %235 = vmatprep.subr.bf16.mxu0 0
  %236 = vmatpush1.bf16.msra.mxu0 %v210
  %237 = vmatprep.subr.bf16.mxu0 0
  %238 = vmatpush1.bf16.msra.mxu0 %v209
  %239 = vmatprep.subr.bf16.mxu0 0
  %240 = vmatpush1.bf16.msra.mxu0 %v208
  %241 = vmatprep.subr.bf16.mxu0 0
  %242 = vmatpush1.bf16.msra.mxu0 %v207
  %243 = vmatprep.subr.bf16.mxu0 0
  %244 = vmatpush1.bf16.msra.mxu0 %v206
  %245 = vmatprep.subr.bf16.mxu0 0
  %246 = vmatpush1.bf16.msra.mxu0 %v205
  %247 = vmatprep.subr.bf16.mxu0 0
  %248 = vmatpush1.bf16.msra.mxu0 %v204
  %249 = vmatprep.subr.bf16.mxu0 0
  %250 = vmatpush1.bf16.msra.mxu0 %v203
  %251 = vmatprep.subr.bf16.mxu0 0
  %252 = vmatpush2.bf16.msra.mxu0 %v218
  %253 = vmatprep.subr.bf16.mxu0 0
  %254 = vmatpush2.bf16.msra.mxu0 %v217
  %255 = vmatprep.subr.bf16.mxu0 0
  %256 = vmatpush2.bf16.msra.mxu0 %v216
  %257 = vmatprep.subr.bf16.mxu0 0
  %258 = vmatpush2.bf16.msra.mxu0 %v215
  %259 = vmatprep.subr.bf16.mxu0 0
  %260 = vmatpush2.bf16.msra.mxu0 %v214
  %261 = vmatprep.subr.bf16.mxu0 0
  %262 = vmatpush2.bf16.msra.mxu0 %v213
  %263 = vmatprep.subr.bf16.mxu0 0
  %264 = vmatpush2.bf16.msra.mxu0 %v212
  %265 = vmatprep.subr.bf16.mxu0 0
  %266 = vmatpush2.bf16.msra.mxu0 %v211
  %267 = vmatprep.mubr.bf16.mxu0 %v44
  %268 = vmatmul.mubr.bf16.gmra.mxu0 %v43
  %v269 = vpop.f32.mrf.mxu0
  %v270 = vadd.f32 0.0, %v269
  %v271 = vpop.f32.mrf.mxu0
  %v272 = vpop.f32.mrf.mxu0
  %v273 = vadd.f32 0.0, %v272
  %v274 = vpop.f32.mrf.mxu0
  %275 = vmatprep.mubr.bf16.mxu0 %v46
  %276 = vmatmul.mubr.bf16.gmra.mxu0 %v45
  %v277 = vpop.f32.mrf.mxu0
  %v278 = vadd.f32 0.0, %v277
  %v279 = vpop.f32.mrf.mxu0
  %v280 = vpop.f32.mrf.mxu0
  %v281 = vadd.f32 0.0, %v280
  %v282 = vpop.f32.mrf.mxu0
  %283 = vmatprep.mubr.bf16.mxu0 %v48
  %284 = vmatmul.mubr.bf16.gmra.mxu0 %v47
  %v285 = vpop.f32.mrf.mxu0
  %v286 = vadd.f32 0.0, %v285
  %v287 = vpop.f32.mrf.mxu0
  %v288 = vpop.f32.mrf.mxu0
  %v289 = vadd.f32 0.0, %v288
  %v290 = vpop.f32.mrf.mxu0
  %291 = vmatprep.mubr.bf16.mxu0 %v50
  %292 = vmatmul.mubr.bf16.gmra.mxu0 %v49
  %v293 = vpop.f32.mrf.mxu0
  %v294 = vadd.f32 0.0, %v293
  %v295 = vpop.f32.mrf.mxu0
  %v296 = vpop.f32.mrf.mxu0
  %v297 = vadd.f32 0.0, %v296
  %v298 = vpop.f32.mrf.mxu0
  %299 = vmatprep.mubr.bf16.mxu0 %v52
  %300 = vmatmul.mubr.bf16.gmra.mxu0 %v51
  %v301 = vpop.f32.mrf.mxu0
  %v302 = vadd.f32 0.0, %v301
  %v303 = vpop.f32.mrf.mxu0
  %v304 = vpop.f32.mrf.mxu0
  %v305 = vadd.f32 0.0, %v304
  %v306 = vpop.f32.mrf.mxu0
  %307 = vmatprep.mubr.bf16.mxu0 %v54
  %308 = vmatmul.mubr.bf16.gmra.mxu0 %v53
  %v309 = vpop.f32.mrf.mxu0
  %v310 = vadd.f32 0.0, %v309
  %v311 = vpop.f32.mrf.mxu0
  %v312 = vpop.f32.mrf.mxu0
  %v313 = vadd.f32 0.0, %v312
  %v314 = vpop.f32.mrf.mxu0
  %315 = vmatprep.mubr.bf16.mxu0 %v56
  %316 = vmatmul.mubr.bf16.gmra.mxu0 %v55
  %v317 = vpop.f32.mrf.mxu0
  %v318 = vadd.f32 0.0, %v317
  %v319 = vpop.f32.mrf.mxu0
  %v320 = vpop.f32.mrf.mxu0
  %v321 = vadd.f32 0.0, %v320
  %v322 = vpop.f32.mrf.mxu0
  %323 = vmatprep.mubr.bf16.mxu0 %v58
  %324 = vmatmul.mubr.bf16.gmra.mxu0 %v57
  %v325 = vpop.f32.mrf.mxu0
  %v326 = vadd.f32 0.0, %v325
  %v327 = vpop.f32.mrf.mxu0
  %v328 = vpop.f32.mrf.mxu0
  %v329 = vadd.f32 0.0, %v328
  %v330 = vpop.f32.mrf.mxu0
  %331 = vmatprep.mubr.bf16.mxu0 %v60
  %332 = vmatmul.mubr.bf16.gmra.mxu0 %v59
  %v333 = vpop.f32.mrf.mxu0
  %v334 = vadd.f32 0.0, %v333
  %v335 = vpop.f32.mrf.mxu0
  %v336 = vpop.f32.mrf.mxu0
  %v337 = vadd.f32 0.0, %v336
  %v338 = vpop.f32.mrf.mxu0
  %339 = vmatprep.mubr.bf16.mxu0 %v62
  %340 = vmatmul.mubr.bf16.gmra.mxu0 %v61
  %v341 = vpop.f32.mrf.mxu0
  %v342 = vadd.f32 0.0, %v341
  %v343 = vpop.f32.mrf.mxu0
  %v344 = vpop.f32.mrf.mxu0
  %v345 = vadd.f32 0.0, %v344
  %v346 = vpop.f32.mrf.mxu0
  %347 = vmatprep.mubr.bf16.mxu0 %v64
  %348 = vmatmul.mubr.bf16.gmra.mxu0 %v63
  %v349 = vpop.f32.mrf.mxu0
  %v350 = vadd.f32 0.0, %v349
  %v351 = vpop.f32.mrf.mxu0
  %v352 = vpop.f32.mrf.mxu0
  %v353 = vadd.f32 0.0, %v352
  %v354 = vpop.f32.mrf.mxu0
  %355 = vmatprep.mubr.bf16.mxu0 %v66
  %356 = vmatmul.mubr.bf16.gmra.mxu0 %v65
  %v357 = vpop.f32.mrf.mxu0
  %v358 = vadd.f32 0.0, %v357
  %v359 = vpop.f32.mrf.mxu0
  %v360 = vpop.f32.mrf.mxu0
  %v361 = vadd.f32 0.0, %v360
  %v362 = vpop.f32.mrf.mxu0
  %363 = vmatprep.mubr.bf16.mxu0 %v68
  %364 = vmatmul.mubr.bf16.gmra.mxu0 %v67
  %v365 = vpop.f32.mrf.mxu0
  %v366 = vadd.f32 0.0, %v365
  %v367 = vpop.f32.mrf.mxu0
  %v368 = vpop.f32.mrf.mxu0
  %v369 = vadd.f32 0.0, %v368
  %v370 = vpop.f32.mrf.mxu0
  %371 = vmatprep.mubr.bf16.mxu0 %v70
  %372 = vmatmul.mubr.bf16.gmra.mxu0 %v69
  %v373 = vpop.f32.mrf.mxu0
  %v374 = vadd.f32 0.0, %v373
  %v375 = vpop.f32.mrf.mxu0
  %v376 = vpop.f32.mrf.mxu0
  %v377 = vadd.f32 0.0, %v376
  %v378 = vpop.f32.mrf.mxu0
  %379 = vmatprep.mubr.bf16.mxu0 %v72
  %380 = vmatmul.mubr.bf16.gmra.mxu0 %v71
  %v381 = vpop.f32.mrf.mxu0
  %v382 = vadd.f32 0.0, %v381
  %v383 = vpop.f32.mrf.mxu0
  %v384 = vpop.f32.mrf.mxu0
  %v385 = vadd.f32 0.0, %v384
  %v386 = vpop.f32.mrf.mxu0
  %387 = vmatprep.mubr.bf16.mxu0 %v74
  %388 = vmatmul.mubr.bf16.gmra.mxu0 %v73
  %v389 = vpop.f32.mrf.mxu0
  %v390 = vadd.f32 0.0, %v389
  %v391 = vpop.f32.mrf.mxu0
  %v392 = vpop.f32.mrf.mxu0
  %v393 = vadd.f32 0.0, %v392
  %v394 = vpop.f32.mrf.mxu0
  %395 = vdwg.mxu0
  %397 = vset.pattern.permute.xlu0 0
  %398 = vperm.xlu0 %397, %v75
  %v399 = vpop.permute.xlu0 %398
  %402 = vset.pattern.permute.xlu0 0
  %403 = vperm.xlu0 %402, %v76
  %v404 = vpop.permute.xlu0 %403
  %407 = vset.pattern.permute.xlu0 0
  %408 = vperm.xlu0 %407, %v77
  %v409 = vpop.permute.xlu0 %408
  %412 = vset.pattern.permute.xlu0 0
  %413 = vperm.xlu0 %412, %v78
  %v414 = vpop.permute.xlu0 %413
  %417 = vset.pattern.permute.xlu0 0
  %418 = vperm.xlu0 %417, %v79
  %v419 = vpop.permute.xlu0 %418
  %422 = vset.pattern.permute.xlu0 0
  %423 = vperm.xlu0 %422, %v80
  %v424 = vpop.permute.xlu0 %423
  %427 = vset.pattern.permute.xlu0 0
  %428 = vperm.xlu0 %427, %v81
  %v429 = vpop.permute.xlu0 %428
  %432 = vset.pattern.permute.xlu0 0
  %433 = vperm.xlu0 %432, %v82
  %v434 = vpop.permute.xlu0 %433
  %437 = vset.pattern.permute.xlu0 0
  %438 = vperm.xlu0 %437, %v83
  %v439 = vpop.permute.xlu0 %438
  %442 = vset.pattern.permute.xlu0 0
  %443 = vperm.xlu0 %442, %v84
  %v444 = vpop.permute.xlu0 %443
  %447 = vset.pattern.permute.xlu0 0
  %448 = vperm.xlu0 %447, %v85
  %v449 = vpop.permute.xlu0 %448
  %452 = vset.pattern.permute.xlu0 0
  %453 = vperm.xlu0 %452, %v86
  %v454 = vpop.permute.xlu0 %453
  %457 = vset.pattern.permute.xlu0 0
  %458 = vperm.xlu0 %457, %v87
  %v459 = vpop.permute.xlu0 %458
  %462 = vset.pattern.permute.xlu0 0
  %463 = vperm.xlu0 %462, %v88
  %v464 = vpop.permute.xlu0 %463
  %467 = vset.pattern.permute.xlu0 0
  %468 = vperm.xlu0 %467, %v89
  %v469 = vpop.permute.xlu0 %468
  %472 = vset.pattern.permute.xlu0 0
  %473 = vperm.xlu0 %472, %v90
  %v474 = vpop.permute.xlu0 %473
  %477 = vset.pattern.permute.xlu0 0
  %478 = vperm.xlu0 %477, %v91
  %v479 = vpop.permute.xlu0 %478
  %482 = vset.pattern.permute.xlu0 0
  %483 = vperm.xlu0 %482, %v92
  %v484 = vpop.permute.xlu0 %483
  %487 = vset.pattern.permute.xlu0 0
  %488 = vperm.xlu0 %487, %v93
  %v489 = vpop.permute.xlu0 %488
  %492 = vset.pattern.permute.xlu0 0
  %493 = vperm.xlu0 %492, %v94
  %v494 = vpop.permute.xlu0 %493
  %497 = vset.pattern.permute.xlu0 0
  %498 = vperm.xlu0 %497, %v95
  %v499 = vpop.permute.xlu0 %498
  %502 = vset.pattern.permute.xlu0 0
  %503 = vperm.xlu0 %502, %v96
  %v504 = vpop.permute.xlu0 %503
  %507 = vset.pattern.permute.xlu0 0
  %508 = vperm.xlu0 %507, %v97
  %v509 = vpop.permute.xlu0 %508
  %512 = vset.pattern.permute.xlu0 0
  %513 = vperm.xlu0 %512, %v98
  %v514 = vpop.permute.xlu0 %513
  %517 = vset.pattern.permute.xlu0 0
  %518 = vperm.xlu0 %517, %v99
  %v519 = vpop.permute.xlu0 %518
  %522 = vset.pattern.permute.xlu0 0
  %523 = vperm.xlu0 %522, %v100
  %v524 = vpop.permute.xlu0 %523
  %527 = vset.pattern.permute.xlu0 0
  %528 = vperm.xlu0 %527, %v101
  %v529 = vpop.permute.xlu0 %528
  %532 = vset.pattern.permute.xlu0 0
  %533 = vperm.xlu0 %532, %v102
  %v534 = vpop.permute.xlu0 %533
  %537 = vset.pattern.permute.xlu0 0
  %538 = vperm.xlu0 %537, %v103
  %v539 = vpop.permute.xlu0 %538
  %542 = vset.pattern.permute.xlu0 0
  %543 = vperm.xlu0 %542, %v104
  %v544 = vpop.permute.xlu0 %543
  %547 = vset.pattern.permute.xlu0 0
  %548 = vperm.xlu0 %547, %v105
  %v549 = vpop.permute.xlu0 %548
  %552 = vset.pattern.permute.xlu0 0
  %553 = vperm.xlu0 %552, %v106
  %v554 = vpop.permute.xlu0 %553
  %v556 = vmul.f32 %v270, %v399
  %v557 = vmul.f32 %v273, %v404
  %v558 = vmul.f32 %v278, %v409
  %v559 = vmul.f32 %v281, %v414
  %v560 = vmul.f32 %v286, %v419
  %v561 = vmul.f32 %v289, %v424
  %v562 = vmul.f32 %v294, %v429
  %v563 = vmul.f32 %v297, %v434
  %v564 = vmul.f32 %v302, %v439
  %v565 = vmul.f32 %v305, %v444
  %v566 = vmul.f32 %v310, %v449
  %v567 = vmul.f32 %v313, %v454
  %v568 = vmul.f32 %v318, %v459
  %v569 = vmul.f32 %v321, %v464
  %v570 = vmul.f32 %v326, %v469
  %v571 = vmul.f32 %v329, %v474
  %v572 = vmul.f32 %v334, %v479
  %v573 = vmul.f32 %v337, %v484
  %v574 = vmul.f32 %v342, %v489
  %v575 = vmul.f32 %v345, %v494
  %v576 = vmul.f32 %v350, %v499
  %v577 = vmul.f32 %v353, %v504
  %v578 = vmul.f32 %v358, %v509
  %v579 = vmul.f32 %v361, %v514
  %v580 = vmul.f32 %v366, %v519
  %v581 = vmul.f32 %v369, %v524
  %v582 = vmul.f32 %v374, %v529
  %v583 = vmul.f32 %v377, %v534
  %v584 = vmul.f32 %v382, %v539
  %v585 = vmul.f32 %v385, %v544
  %v586 = vmul.f32 %v390, %v549
  %v587 = vmul.f32 %v393, %v554
  %v588 = vpack.c.bf16 %v557, %v556
  %v589 = vpack.c.bf16 %v559, %v558
  %v590 = vpack.c.bf16 %v561, %v560
  %v591 = vpack.c.bf16 %v563, %v562
  %v592 = vpack.c.bf16 %v565, %v564
  %v593 = vpack.c.bf16 %v567, %v566
  %v594 = vpack.c.bf16 %v569, %v568
  %v595 = vpack.c.bf16 %v571, %v570
  %v596 = vpack.c.bf16 %v573, %v572
  %v597 = vpack.c.bf16 %v575, %v574
  %v598 = vpack.c.bf16 %v577, %v576
  %v599 = vpack.c.bf16 %v579, %v578
  %v600 = vpack.c.bf16 %v581, %v580
  %v601 = vpack.c.bf16 %v583, %v582
  %v602 = vpack.c.bf16 %v585, %v584
  %v603 = vpack.c.bf16 %v587, %v586
  %v604 = vld [vmem:[%s3] sm:$0xf]
  %v605 = vld [vmem:[%s3 + $0x4] sm:$0xf]
  %v606 = vld [vmem:[%s3 + $0x8] sm:$0xf]
  %v607 = vld [vmem:[%s3 + $0xc] sm:$0xf]
  %v608 = vld [vmem:[%s3 + $0x10] sm:$0xf]
  %v609 = vld [vmem:[%s3 + $0x14] sm:$0xf]
  %v610 = vld [vmem:[%s3 + $0x18] sm:$0xf]
  %v611 = vld [vmem:[%s3 + $0x1c] sm:$0xf]
  %v612 = vld [vmem:[%s3 + $0x20] sm:$0xf]
  %v613 = vld [vmem:[%s3 + $0x24] sm:$0xf]
  %v614 = vld [vmem:[%s3 + $0x28] sm:$0xf]
  %v615 = vld [vmem:[%s3 + $0x2c] sm:$0xf]
  %v616 = vld [vmem:[%s3 + $0x30] sm:$0xf]
  %v617 = vld [vmem:[%s3 + $0x34] sm:$0xf]
  %v618 = vld [vmem:[%s3 + $0x38] sm:$0xf]
  %v619 = vld [vmem:[%s3 + $0x3c] sm:$0xf]
  %v620 = vld [vmem:[%s4] sm:$0x1]
  %v622 = vlaneseq
  %v623 = vshrl.u32 %v622, 7
  %v624 = vsub.s32 0, %v623
  %v625 = vrot.slane %v620, %v624
  %v643 = vunpack.c.l.b16 %v604
  %v644 = vunpack.c.l.b16 %v605
  %v645 = vunpack.c.l.b16 %v606
  %v646 = vunpack.c.l.b16 %v607
  %v647 = vunpack.c.l.b16 %v608
  %v648 = vunpack.c.l.b16 %v609
  %v649 = vunpack.c.l.b16 %v610
  %v650 = vunpack.c.l.b16 %v611
  %v651 = vunpack.c.l.b16 %v612
  %v652 = vunpack.c.l.b16 %v613
  %v653 = vunpack.c.l.b16 %v614
  %v654 = vunpack.c.l.b16 %v615
  %v655 = vunpack.c.l.b16 %v616
  %v656 = vunpack.c.l.b16 %v617
  %v657 = vunpack.c.l.b16 %v618
  %v658 = vunpack.c.l.b16 %v619
  %v659 = vpack.c.b16 %v644, %v643
  %v660 = vpack.c.b16 %v646, %v645
  %v661 = vpack.c.b16 %v648, %v647
  %v662 = vpack.c.b16 %v650, %v649
  %v663 = vpack.c.b16 %v652, %v651
  %v664 = vpack.c.b16 %v654, %v653
  %v665 = vpack.c.b16 %v656, %v655
  %v666 = vpack.c.b16 %v658, %v657
  %675 = vmatprep.subr.bf16.mxu0 0
  %676 = vmatpush1.bf16.msra.mxu0 %v666
  %677 = vmatprep.subr.bf16.mxu0 0
  %678 = vmatpush1.bf16.msra.mxu0 %v665
  %679 = vmatprep.subr.bf16.mxu0 0
  %680 = vmatpush1.bf16.msra.mxu0 %v664
  %681 = vmatprep.subr.bf16.mxu0 0
  %682 = vmatpush1.bf16.msra.mxu0 %v663
  %683 = vmatprep.subr.bf16.mxu0 0
  %684 = vmatpush1.bf16.msra.mxu0 %v662
  %685 = vmatprep.subr.bf16.mxu0 0
  %686 = vmatpush1.bf16.msra.mxu0 %v661
  %687 = vmatprep.subr.bf16.mxu0 0
  %688 = vmatpush1.bf16.msra.mxu0 %v660
  %689 = vmatprep.subr.bf16.mxu0 0
  %690 = vmatpush1.bf16.msra.mxu0 %v659
  %691 = vmatprep.subr.bf16.mxu0 0
  %692 = vmatpush2.bf16.msra.mxu0 0
  %693 = vmatprep.subr.bf16.mxu0 0
  %694 = vmatpush2.bf16.msra.mxu0 0
  %695 = vmatprep.subr.bf16.mxu0 0
  %696 = vmatpush2.bf16.msra.mxu0 0
  %697 = vmatprep.subr.bf16.mxu0 0
  %698 = vmatpush2.bf16.msra.mxu0 0
  %699 = vmatprep.subr.bf16.mxu0 0
  %700 = vmatpush2.bf16.msra.mxu0 0
  %701 = vmatprep.subr.bf16.mxu0 0
  %702 = vmatpush2.bf16.msra.mxu0 0
  %703 = vmatprep.subr.bf16.mxu0 0
  %704 = vmatpush2.bf16.msra.mxu0 0
  %705 = vmatprep.subr.bf16.mxu0 0
  %706 = vmatpush2.bf16.msra.mxu0 0
  %707 = vmatprep.mubr.bf16.mxu0 0
  %708 = vmatmul.mubr.bf16.gmra.mxu0 %v588
  %v709 = vpop.f32.mrf.mxu0
  %v710 = vadd.f32 %v625, %v709
  %v711 = vpop.f32.mrf.mxu0
  %v712 = vpop.f32.mrf.mxu0
  %v713 = vadd.f32 %v625, %v712
  %v714 = vpop.f32.mrf.mxu0
  %715 = vmatprep.mubr.bf16.mxu0 0
  %716 = vmatmul.mubr.bf16.gmra.mxu0 %v589
  %v717 = vpop.f32.mrf.mxu0
  %v718 = vadd.f32 %v625, %v717
  %v719 = vpop.f32.mrf.mxu0
  %v720 = vpop.f32.mrf.mxu0
  %v721 = vadd.f32 %v625, %v720
  %v722 = vpop.f32.mrf.mxu0
  %723 = vmatprep.mubr.bf16.mxu0 0
  %724 = vmatmul.mubr.bf16.gmra.mxu0 %v590
  %v725 = vpop.f32.mrf.mxu0
  %v726 = vadd.f32 %v625, %v725
  %v727 = vpop.f32.mrf.mxu0
  %v728 = vpop.f32.mrf.mxu0
  %v729 = vadd.f32 %v625, %v728
  %v730 = vpop.f32.mrf.mxu0
  %731 = vmatprep.mubr.bf16.mxu0 0
  %732 = vmatmul.mubr.bf16.gmra.mxu0 %v591
  %v733 = vpop.f32.mrf.mxu0
  %v734 = vadd.f32 %v625, %v733
  %v735 = vpop.f32.mrf.mxu0
  %v736 = vpop.f32.mrf.mxu0
  %v737 = vadd.f32 %v625, %v736
  %v738 = vpop.f32.mrf.mxu0
  %739 = vmatprep.mubr.bf16.mxu0 0
  %740 = vmatmul.mubr.bf16.gmra.mxu0 %v592
  %v741 = vpop.f32.mrf.mxu0
  %v742 = vadd.f32 %v625, %v741
  %v743 = vpop.f32.mrf.mxu0
  %v744 = vpop.f32.mrf.mxu0
  %v745 = vadd.f32 %v625, %v744
  %v746 = vpop.f32.mrf.mxu0
  %747 = vmatprep.mubr.bf16.mxu0 0
  %748 = vmatmul.mubr.bf16.gmra.mxu0 %v593
  %v749 = vpop.f32.mrf.mxu0
  %v750 = vadd.f32 %v625, %v749
  %v751 = vpop.f32.mrf.mxu0
  %v752 = vpop.f32.mrf.mxu0
  %v753 = vadd.f32 %v625, %v752
  %v754 = vpop.f32.mrf.mxu0
  %755 = vmatprep.mubr.bf16.mxu0 0
  %756 = vmatmul.mubr.bf16.gmra.mxu0 %v594
  %v757 = vpop.f32.mrf.mxu0
  %v758 = vadd.f32 %v625, %v757
  %v759 = vpop.f32.mrf.mxu0
  %v760 = vpop.f32.mrf.mxu0
  %v761 = vadd.f32 %v625, %v760
  %v762 = vpop.f32.mrf.mxu0
  %763 = vmatprep.mubr.bf16.mxu0 0
  %764 = vmatmul.mubr.bf16.gmra.mxu0 %v595
  %v765 = vpop.f32.mrf.mxu0
  %v766 = vadd.f32 %v625, %v765
  %v767 = vpop.f32.mrf.mxu0
  %v768 = vpop.f32.mrf.mxu0
  %v769 = vadd.f32 %v625, %v768
  %v770 = vpop.f32.mrf.mxu0
  %771 = vmatprep.mubr.bf16.mxu0 0
  %772 = vmatmul.mubr.bf16.gmra.mxu0 %v596
  %v773 = vpop.f32.mrf.mxu0
  %v774 = vadd.f32 %v625, %v773
  %v775 = vpop.f32.mrf.mxu0
  %v776 = vpop.f32.mrf.mxu0
  %v777 = vadd.f32 %v625, %v776
  %v778 = vpop.f32.mrf.mxu0
  %779 = vmatprep.mubr.bf16.mxu0 0
  %780 = vmatmul.mubr.bf16.gmra.mxu0 %v597
  %v781 = vpop.f32.mrf.mxu0
  %v782 = vadd.f32 %v625, %v781
  %v783 = vpop.f32.mrf.mxu0
  %v784 = vpop.f32.mrf.mxu0
  %v785 = vadd.f32 %v625, %v784
  %v786 = vpop.f32.mrf.mxu0
  %787 = vmatprep.mubr.bf16.mxu0 0
  %788 = vmatmul.mubr.bf16.gmra.mxu0 %v598
  %v789 = vpop.f32.mrf.mxu0
  %v790 = vadd.f32 %v625, %v789
  %v791 = vpop.f32.mrf.mxu0
  %v792 = vpop.f32.mrf.mxu0
  %v793 = vadd.f32 %v625, %v792
  %v794 = vpop.f32.mrf.mxu0
  %795 = vmatprep.mubr.bf16.mxu0 0
  %796 = vmatmul.mubr.bf16.gmra.mxu0 %v599
  %v797 = vpop.f32.mrf.mxu0
  %v798 = vadd.f32 %v625, %v797
  %v799 = vpop.f32.mrf.mxu0
  %v800 = vpop.f32.mrf.mxu0
  %v801 = vadd.f32 %v625, %v800
  %v802 = vpop.f32.mrf.mxu0
  %803 = vmatprep.mubr.bf16.mxu0 0
  %804 = vmatmul.mubr.bf16.gmra.mxu0 %v600
  %v805 = vpop.f32.mrf.mxu0
  %v806 = vadd.f32 %v625, %v805
  %v807 = vpop.f32.mrf.mxu0
  %v808 = vpop.f32.mrf.mxu0
  %v809 = vadd.f32 %v625, %v808
  %v810 = vpop.f32.mrf.mxu0
  %811 = vmatprep.mubr.bf16.mxu0 0
  %812 = vmatmul.mubr.bf16.gmra.mxu0 %v601
  %v813 = vpop.f32.mrf.mxu0
  %v814 = vadd.f32 %v625, %v813
  %v815 = vpop.f32.mrf.mxu0
  %v816 = vpop.f32.mrf.mxu0
  %v817 = vadd.f32 %v625, %v816
  %v818 = vpop.f32.mrf.mxu0
  %819 = vmatprep.mubr.bf16.mxu0 0
  %820 = vmatmul.mubr.bf16.gmra.mxu0 %v602
  %v821 = vpop.f32.mrf.mxu0
  %v822 = vadd.f32 %v625, %v821
  %v823 = vpop.f32.mrf.mxu0
  %v824 = vpop.f32.mrf.mxu0
  %v825 = vadd.f32 %v625, %v824
  %v826 = vpop.f32.mrf.mxu0
  %827 = vmatprep.mubr.bf16.mxu0 0
  %828 = vmatmul.mubr.bf16.gmra.mxu0 %v603
  %v829 = vpop.f32.mrf.mxu0
  %v830 = vadd.f32 %v625, %v829
  %v831 = vpop.f32.mrf.mxu0
  %v832 = vpop.f32.mrf.mxu0
  %v833 = vadd.f32 %v625, %v832
  %v834 = vpop.f32.mrf.mxu0
  %835 = vdwg.mxu0
  %v836 = vmax.f32 %v710, 0.0
  %v837 = vmax.f32 %v713, 0.0
  %v838 = vmax.f32 %v718, 0.0
  %v839 = vmax.f32 %v721, 0.0
  %v840 = vmax.f32 %v726, 0.0
  %v841 = vmax.f32 %v729, 0.0
  %v842 = vmax.f32 %v734, 0.0
  %v843 = vmax.f32 %v737, 0.0
  %v844 = vmax.f32 %v742, 0.0
  %v845 = vmax.f32 %v745, 0.0
  %v846 = vmax.f32 %v750, 0.0
  %v847 = vmax.f32 %v753, 0.0
  %v848 = vmax.f32 %v758, 0.0
  %v849 = vmax.f32 %v761, 0.0
  %v850 = vmax.f32 %v766, 0.0
  %v851 = vmax.f32 %v769, 0.0
  %v852 = vmax.f32 %v774, 0.0
  %v853 = vmax.f32 %v777, 0.0
  %v854 = vmax.f32 %v782, 0.0
  %v855 = vmax.f32 %v785, 0.0
  %v856 = vmax.f32 %v790, 0.0
  %v857 = vmax.f32 %v793, 0.0
  %v858 = vmax.f32 %v798, 0.0
  %v859 = vmax.f32 %v801, 0.0
  %v860 = vmax.f32 %v806, 0.0
  %v861 = vmax.f32 %v809, 0.0
  %v862 = vmax.f32 %v814, 0.0
  %v863 = vmax.f32 %v817, 0.0
  %v864 = vmax.f32 %v822, 0.0
  %v865 = vmax.f32 %v825, 0.0
  %v866 = vmax.f32 %v830, 0.0
  %v867 = vmax.f32 %v833, 0.0
  %v868 = vmul.f32 %v836, %v399
  %v869 = vmul.f32 %v837, %v404
  %v870 = vmul.f32 %v838, %v409
  %v871 = vmul.f32 %v839, %v414
  %v872 = vmul.f32 %v840, %v419
  %v873 = vmul.f32 %v841, %v424
  %v874 = vmul.f32 %v842, %v429
  %v875 = vmul.f32 %v843, %v434
  %v876 = vmul.f32 %v844, %v439
  %v877 = vmul.f32 %v845, %v444
  %v878 = vmul.f32 %v846, %v449
  %v879 = vmul.f32 %v847, %v454
  %v880 = vmul.f32 %v848, %v459
  %v881 = vmul.f32 %v849, %v464
  %v882 = vmul.f32 %v850, %v469
  %v883 = vmul.f32 %v851, %v474
  %v884 = vmul.f32 %v852, %v479
  %v885 = vmul.f32 %v853, %v484
  %v886 = vmul.f32 %v854, %v489
  %v887 = vmul.f32 %v855, %v494
  %v888 = vmul.f32 %v856, %v499
  %v889 = vmul.f32 %v857, %v504
  %v890 = vmul.f32 %v858, %v509
  %v891 = vmul.f32 %v859, %v514
  %v892 = vmul.f32 %v860, %v519
  %v893 = vmul.f32 %v861, %v524
  %v894 = vmul.f32 %v862, %v529
  %v895 = vmul.f32 %v863, %v534
  %v896 = vmul.f32 %v864, %v539
  %v897 = vmul.f32 %v865, %v544
  %v898 = vmul.f32 %v866, %v549
  %v899 = vmul.f32 %v867, %v554
  %v900 = vpack.c.bf16 %v869, %v868
  %v901 = vpack.c.bf16 %v871, %v870
  %v902 = vpack.c.bf16 %v873, %v872
  %v903 = vpack.c.bf16 %v875, %v874
  %v904 = vpack.c.bf16 %v877, %v876
  %v905 = vpack.c.bf16 %v879, %v878
  %v906 = vpack.c.bf16 %v881, %v880
  %v907 = vpack.c.bf16 %v883, %v882
  %v908 = vpack.c.bf16 %v885, %v884
  %v909 = vpack.c.bf16 %v887, %v886
  %v910 = vpack.c.bf16 %v889, %v888
  %v911 = vpack.c.bf16 %v891, %v890
  %v912 = vpack.c.bf16 %v893, %v892
  %v913 = vpack.c.bf16 %v895, %v894
  %v914 = vpack.c.bf16 %v897, %v896
  %v915 = vpack.c.bf16 %v899, %v898
  %v916 = vld [vmem:[%s5] sm:$0xf]
  %v917 = vld [vmem:[%s5 + $0x4] sm:$0xf]
  %v918 = vld [vmem:[%s5 + $0x8] sm:$0xf]
  %v919 = vld [vmem:[%s5 + $0xc] sm:$0xf]
  %v920 = vld [vmem:[%s5 + $0x10] sm:$0xf]
  %v921 = vld [vmem:[%s5 + $0x14] sm:$0xf]
  %v922 = vld [vmem:[%s5 + $0x18] sm:$0xf]
  %v923 = vld [vmem:[%s5 + $0x1c] sm:$0xf]
  %v924 = vld [vmem:[%s5 + $0x20] sm:$0xf]
  %v925 = vld [vmem:[%s5 + $0x24] sm:$0xf]
  %v926 = vld [vmem:[%s5 + $0x28] sm:$0xf]
  %v927 = vld [vmem:[%s5 + $0x2c] sm:$0xf]
  %v928 = vld [vmem:[%s5 + $0x30] sm:$0xf]
  %v929 = vld [vmem:[%s5 + $0x34] sm:$0xf]
  %v930 = vld [vmem:[%s5 + $0x38] sm:$0xf]
  %v931 = vld [vmem:[%s5 + $0x3c] sm:$0xf]
  %v948 = vunpack.c.l.b16 %v916
  %v949 = vunpack.c.l.b16 %v917
  %v950 = vunpack.c.l.b16 %v918
  %v951 = vunpack.c.l.b16 %v919
  %v952 = vunpack.c.l.b16 %v920
  %v953 = vunpack.c.l.b16 %v921
  %v954 = vunpack.c.l.b16 %v922
  %v955 = vunpack.c.l.b16 %v923
  %v956 = vunpack.c.l.b16 %v924
  %v957 = vunpack.c.l.b16 %v925
  %v958 = vunpack.c.l.b16 %v926
  %v959 = vunpack.c.l.b16 %v927
  %v960 = vunpack.c.l.b16 %v928
  %v961 = vunpack.c.l.b16 %v929
  %v962 = vunpack.c.l.b16 %v930
  %v963 = vunpack.c.l.b16 %v931
  %v964 = vpack.c.b16 %v949, %v948
  %v965 = vpack.c.b16 %v951, %v950
  %v966 = vpack.c.b16 %v953, %v952
  %v967 = vpack.c.b16 %v955, %v954
  %v968 = vpack.c.b16 %v957, %v956
  %v969 = vpack.c.b16 %v959, %v958
  %v970 = vpack.c.b16 %v961, %v960
  %v971 = vpack.c.b16 %v963, %v962
  %980 = vmatprep.subr.bf16.mxu0 0
  %981 = vmatpush1.bf16.msra.mxu0 %v971
  %982 = vmatprep.subr.bf16.mxu0 0
  %983 = vmatpush1.bf16.msra.mxu0 %v970
  %984 = vmatprep.subr.bf16.mxu0 0
  %985 = vmatpush1.bf16.msra.mxu0 %v969
  %986 = vmatprep.subr.bf16.mxu0 0
  %987 = vmatpush1.bf16.msra.mxu0 %v968
  %988 = vmatprep.subr.bf16.mxu0 0
  %989 = vmatpush1.bf16.msra.mxu0 %v967
  %990 = vmatprep.subr.bf16.mxu0 0
  %991 = vmatpush1.bf16.msra.mxu0 %v966
  %992 = vmatprep.subr.bf16.mxu0 0
  %993 = vmatpush1.bf16.msra.mxu0 %v965
  %994 = vmatprep.subr.bf16.mxu0 0
  %995 = vmatpush1.bf16.msra.mxu0 %v964
  %996 = vmatprep.subr.bf16.mxu0 0
  %997 = vmatpush2.bf16.msra.mxu0 0
  %998 = vmatprep.subr.bf16.mxu0 0
  %999 = vmatpush2.bf16.msra.mxu0 0
  %1000 = vmatprep.subr.bf16.mxu0 0
  %1001 = vmatpush2.bf16.msra.mxu0 0
  %1002 = vmatprep.subr.bf16.mxu0 0
  %1003 = vmatpush2.bf16.msra.mxu0 0
  %1004 = vmatprep.subr.bf16.mxu0 0
  %1005 = vmatpush2.bf16.msra.mxu0 0
  %1006 = vmatprep.subr.bf16.mxu0 0
  %1007 = vmatpush2.bf16.msra.mxu0 0
  %1008 = vmatprep.subr.bf16.mxu0 0
  %1009 = vmatpush2.bf16.msra.mxu0 0
  %1010 = vmatprep.subr.bf16.mxu0 0
  %1011 = vmatpush2.bf16.msra.mxu0 0
  %1012 = vmatprep.mubr.bf16.mxu0 0
  %1013 = vmatmul.mubr.bf16.gmra.mxu0 %v900
  %v1014 = vpop.f32.mrf.mxu0
  %v1015 = vadd.f32 0.0, %v1014
  %v1016 = vpop.f32.mrf.mxu0
  %v1017 = vpop.f32.mrf.mxu0
  %v1018 = vadd.f32 0.0, %v1017
  %v1019 = vpop.f32.mrf.mxu0
  %1020 = vmatprep.mubr.bf16.mxu0 0
  %1021 = vmatmul.mubr.bf16.gmra.mxu0 %v901
  %v1022 = vpop.f32.mrf.mxu0
  %v1023 = vadd.f32 0.0, %v1022
  %v1024 = vpop.f32.mrf.mxu0
  %v1025 = vpop.f32.mrf.mxu0
  %v1026 = vadd.f32 0.0, %v1025
  %v1027 = vpop.f32.mrf.mxu0
  %1028 = vmatprep.mubr.bf16.mxu0 0
  %1029 = vmatmul.mubr.bf16.gmra.mxu0 %v902
  %v1030 = vpop.f32.mrf.mxu0
  %v1031 = vadd.f32 0.0, %v1030
  %v1032 = vpop.f32.mrf.mxu0
  %v1033 = vpop.f32.mrf.mxu0
  %v1034 = vadd.f32 0.0, %v1033
  %v1035 = vpop.f32.mrf.mxu0
  %1036 = vmatprep.mubr.bf16.mxu0 0
  %1037 = vmatmul.mubr.bf16.gmra.mxu0 %v903
  %v1038 = vpop.f32.mrf.mxu0
  %v1039 = vadd.f32 0.0, %v1038
  %v1040 = vpop.f32.mrf.mxu0
  %v1041 = vpop.f32.mrf.mxu0
  %v1042 = vadd.f32 0.0, %v1041
  %v1043 = vpop.f32.mrf.mxu0
  %1044 = vmatprep.mubr.bf16.mxu0 0
  %1045 = vmatmul.mubr.bf16.gmra.mxu0 %v904
  %v1046 = vpop.f32.mrf.mxu0
  %v1047 = vadd.f32 0.0, %v1046
  %v1048 = vpop.f32.mrf.mxu0
  %v1049 = vpop.f32.mrf.mxu0
  %v1050 = vadd.f32 0.0, %v1049
  %v1051 = vpop.f32.mrf.mxu0
  %1052 = vmatprep.mubr.bf16.mxu0 0
  %1053 = vmatmul.mubr.bf16.gmra.mxu0 %v905
  %v1054 = vpop.f32.mrf.mxu0
  %v1055 = vadd.f32 0.0, %v1054
  %v1056 = vpop.f32.mrf.mxu0
  %v1057 = vpop.f32.mrf.mxu0
  %v1058 = vadd.f32 0.0, %v1057
  %v1059 = vpop.f32.mrf.mxu0
  %1060 = vmatprep.mubr.bf16.mxu0 0
  %1061 = vmatmul.mubr.bf16.gmra.mxu0 %v906
  %v1062 = vpop.f32.mrf.mxu0
  %v1063 = vadd.f32 0.0, %v1062
  %v1064 = vpop.f32.mrf.mxu0
  %v1065 = vpop.f32.mrf.mxu0
  %v1066 = vadd.f32 0.0, %v1065
  %v1067 = vpop.f32.mrf.mxu0
  %1068 = vmatprep.mubr.bf16.mxu0 0
  %1069 = vmatmul.mubr.bf16.gmra.mxu0 %v907
  %v1070 = vpop.f32.mrf.mxu0
  %v1071 = vadd.f32 0.0, %v1070
  %v1072 = vpop.f32.mrf.mxu0
  %v1073 = vpop.f32.mrf.mxu0
  %v1074 = vadd.f32 0.0, %v1073
  %v1075 = vpop.f32.mrf.mxu0
  %1076 = vmatprep.mubr.bf16.mxu0 0
  %1077 = vmatmul.mubr.bf16.gmra.mxu0 %v908
  %v1078 = vpop.f32.mrf.mxu0
  %v1079 = vadd.f32 0.0, %v1078
  %v1080 = vpop.f32.mrf.mxu0
  %v1081 = vpop.f32.mrf.mxu0
  %v1082 = vadd.f32 0.0, %v1081
  %v1083 = vpop.f32.mrf.mxu0
  %1084 = vmatprep.mubr.bf16.mxu0 0
  %1085 = vmatmul.mubr.bf16.gmra.mxu0 %v909
  %v1086 = vpop.f32.mrf.mxu0
  %v1087 = vadd.f32 0.0, %v1086
  %v1088 = vpop.f32.mrf.mxu0
  %v1089 = vpop.f32.mrf.mxu0
  %v1090 = vadd.f32 0.0, %v1089
  %v1091 = vpop.f32.mrf.mxu0
  %1092 = vmatprep.mubr.bf16.mxu0 0
  %1093 = vmatmul.mubr.bf16.gmra.mxu0 %v910
  %v1094 = vpop.f32.mrf.mxu0
  %v1095 = vadd.f32 0.0, %v1094
  %v1096 = vpop.f32.mrf.mxu0
  %v1097 = vpop.f32.mrf.mxu0
  %v1098 = vadd.f32 0.0, %v1097
  %v1099 = vpop.f32.mrf.mxu0
  %1100 = vmatprep.mubr.bf16.mxu0 0
  %1101 = vmatmul.mubr.bf16.gmra.mxu0 %v911
  %v1102 = vpop.f32.mrf.mxu0
  %v1103 = vadd.f32 0.0, %v1102
  %v1104 = vpop.f32.mrf.mxu0
  %v1105 = vpop.f32.mrf.mxu0
  %v1106 = vadd.f32 0.0, %v1105
  %v1107 = vpop.f32.mrf.mxu0
  %1108 = vmatprep.mubr.bf16.mxu0 0
  %1109 = vmatmul.mubr.bf16.gmra.mxu0 %v912
  %v1110 = vpop.f32.mrf.mxu0
  %v1111 = vadd.f32 0.0, %v1110
  %v1112 = vpop.f32.mrf.mxu0
  %v1113 = vpop.f32.mrf.mxu0
  %v1114 = vadd.f32 0.0, %v1113
  %v1115 = vpop.f32.mrf.mxu0
  %1116 = vmatprep.mubr.bf16.mxu0 0
  %1117 = vmatmul.mubr.bf16.gmra.mxu0 %v913
  %v1118 = vpop.f32.mrf.mxu0
  %v1119 = vadd.f32 0.0, %v1118
  %v1120 = vpop.f32.mrf.mxu0
  %v1121 = vpop.f32.mrf.mxu0
  %v1122 = vadd.f32 0.0, %v1121
  %v1123 = vpop.f32.mrf.mxu0
  %1124 = vmatprep.mubr.bf16.mxu0 0
  %1125 = vmatmul.mubr.bf16.gmra.mxu0 %v914
  %v1126 = vpop.f32.mrf.mxu0
  %v1127 = vadd.f32 0.0, %v1126
  %v1128 = vpop.f32.mrf.mxu0
  %v1129 = vpop.f32.mrf.mxu0
  %v1130 = vadd.f32 0.0, %v1129
  %v1131 = vpop.f32.mrf.mxu0
  %1132 = vmatprep.mubr.bf16.mxu0 0
  %1133 = vmatmul.mubr.bf16.gmra.mxu0 %v915
  %v1134 = vpop.f32.mrf.mxu0
  %v1135 = vadd.f32 0.0, %v1134
  %v1136 = vpop.f32.mrf.mxu0
  %v1137 = vpop.f32.mrf.mxu0
  %v1138 = vadd.f32 0.0, %v1137
  %v1139 = vpop.f32.mrf.mxu0
  %1140 = vdwg.mxu0
  %v1141 = vpack.c.bf16 %v1018, %v1015
  %v1142 = vpack.c.bf16 %v1026, %v1023
  %v1143 = vpack.c.bf16 %v1034, %v1031
  %v1144 = vpack.c.bf16 %v1042, %v1039
  %v1145 = vpack.c.bf16 %v1050, %v1047
  %v1146 = vpack.c.bf16 %v1058, %v1055
  %v1147 = vpack.c.bf16 %v1066, %v1063
  %v1148 = vpack.c.bf16 %v1074, %v1071
  %v1149 = vpack.c.bf16 %v1082, %v1079
  %v1150 = vpack.c.bf16 %v1090, %v1087
  %v1151 = vpack.c.bf16 %v1098, %v1095
  %v1152 = vpack.c.bf16 %v1106, %v1103
  %v1153 = vpack.c.bf16 %v1114, %v1111
  %v1154 = vpack.c.bf16 %v1122, %v1119
  %v1155 = vpack.c.bf16 %v1130, %v1127
  %v1156 = vpack.c.bf16 %v1138, %v1135
  %1157 = vmatprep.subr.bf16.mxu0 0
  %1158 = vmatpush1.bf16.msra.mxu0 %v1148
  %1159 = vmatprep.subr.bf16.mxu0 0
  %1160 = vmatpush1.bf16.msra.mxu0 %v1147
  %1161 = vmatprep.subr.bf16.mxu0 0
  %1162 = vmatpush1.bf16.msra.mxu0 %v1146
  %1163 = vmatprep.subr.bf16.mxu0 0
  %1164 = vmatpush1.bf16.msra.mxu0 %v1145
  %1165 = vmatprep.subr.bf16.mxu0 0
  %1166 = vmatpush1.bf16.msra.mxu0 %v1144
  %1167 = vmatprep.subr.bf16.mxu0 0
  %1168 = vmatpush1.bf16.msra.mxu0 %v1143
  %1169 = vmatprep.subr.bf16.mxu0 0
  %1170 = vmatpush1.bf16.msra.mxu0 %v1142
  %1171 = vmatprep.subr.bf16.mxu0 0
  %1172 = vmatpush1.bf16.msra.mxu0 %v1141
  %1173 = vmatprep.subr.bf16.mxu0 0
  %1174 = vmatpush2.bf16.msra.mxu0 %v1156
  %1175 = vmatprep.subr.bf16.mxu0 0
  %1176 = vmatpush2.bf16.msra.mxu0 %v1155
  %1177 = vmatprep.subr.bf16.mxu0 0
  %1178 = vmatpush2.bf16.msra.mxu0 %v1154
  %1179 = vmatprep.subr.bf16.mxu0 0
  %1180 = vmatpush2.bf16.msra.mxu0 %v1153
  %1181 = vmatprep.subr.bf16.mxu0 0
  %1182 = vmatpush2.bf16.msra.mxu0 %v1152
  %1183 = vmatprep.subr.bf16.mxu0 0
  %1184 = vmatpush2.bf16.msra.mxu0 %v1151
  %1185 = vmatprep.subr.bf16.mxu0 0
  %1186 = vmatpush2.bf16.msra.mxu0 %v1150
  %1187 = vmatprep.subr.bf16.mxu0 0
  %1188 = vmatpush2.bf16.msra.mxu0 %v1149
  %1189 = vmatprep.mubr.bf16.mxu0 %v44
  %1190 = vmatmul.mubr.bf16.gmra.mxu0 %v43
  %v1191 = vpop.f32.mrf.mxu0
  %v1192 = vadd.f32 0.0, %v1191
  %v1193 = vpop.f32.mrf.mxu0
  %v1194 = vpop.f32.mrf.mxu0
  %v1195 = vadd.f32 0.0, %v1194
  %v1196 = vpop.f32.mrf.mxu0
  %1197 = vmatprep.mubr.bf16.mxu0 %v46
  %1198 = vmatmul.mubr.bf16.gmra.mxu0 %v45
  %v1199 = vpop.f32.mrf.mxu0
  %v1200 = vadd.f32 0.0, %v1199
  %v1201 = vpop.f32.mrf.mxu0
  %v1202 = vpop.f32.mrf.mxu0
  %v1203 = vadd.f32 0.0, %v1202
  %v1204 = vpop.f32.mrf.mxu0
  %1205 = vmatprep.mubr.bf16.mxu0 %v48
  %1206 = vmatmul.mubr.bf16.gmra.mxu0 %v47
  %v1207 = vpop.f32.mrf.mxu0
  %v1208 = vadd.f32 0.0, %v1207
  %v1209 = vpop.f32.mrf.mxu0
  %v1210 = vpop.f32.mrf.mxu0
  %v1211 = vadd.f32 0.0, %v1210
  %v1212 = vpop.f32.mrf.mxu0
  %1213 = vmatprep.mubr.bf16.mxu0 %v50
  %1214 = vmatmul.mubr.bf16.gmra.mxu0 %v49
  %v1215 = vpop.f32.mrf.mxu0
  %v1216 = vadd.f32 0.0, %v1215
  %v1217 = vpop.f32.mrf.mxu0
  %v1218 = vpop.f32.mrf.mxu0
  %v1219 = vadd.f32 0.0, %v1218
  %v1220 = vpop.f32.mrf.mxu0
  %1221 = vmatprep.mubr.bf16.mxu0 %v52
  %1222 = vmatmul.mubr.bf16.gmra.mxu0 %v51
  %v1223 = vpop.f32.mrf.mxu0
  %v1224 = vadd.f32 0.0, %v1223
  %v1225 = vpop.f32.mrf.mxu0
  %v1226 = vpop.f32.mrf.mxu0
  %v1227 = vadd.f32 0.0, %v1226
  %v1228 = vpop.f32.mrf.mxu0
  %1229 = vmatprep.mubr.bf16.mxu0 %v54
  %1230 = vmatmul.mubr.bf16.gmra.mxu0 %v53
  %v1231 = vpop.f32.mrf.mxu0
  %v1232 = vadd.f32 0.0, %v1231
  %v1233 = vpop.f32.mrf.mxu0
  %v1234 = vpop.f32.mrf.mxu0
  %v1235 = vadd.f32 0.0, %v1234
  %v1236 = vpop.f32.mrf.mxu0
  %1237 = vmatprep.mubr.bf16.mxu0 %v56
  %1238 = vmatmul.mubr.bf16.gmra.mxu0 %v55
  %v1239 = vpop.f32.mrf.mxu0
  %v1240 = vadd.f32 0.0, %v1239
  %v1241 = vpop.f32.mrf.mxu0
  %v1242 = vpop.f32.mrf.mxu0
  %v1243 = vadd.f32 0.0, %v1242
  %v1244 = vpop.f32.mrf.mxu0
  %1245 = vmatprep.mubr.bf16.mxu0 %v58
  %1246 = vmatmul.mubr.bf16.gmra.mxu0 %v57
  %v1247 = vpop.f32.mrf.mxu0
  %v1248 = vadd.f32 0.0, %v1247
  %v1249 = vpop.f32.mrf.mxu0
  %v1250 = vpop.f32.mrf.mxu0
  %v1251 = vadd.f32 0.0, %v1250
  %v1252 = vpop.f32.mrf.mxu0
  %1253 = vmatprep.mubr.bf16.mxu0 %v60
  %1254 = vmatmul.mubr.bf16.gmra.mxu0 %v59
  %v1255 = vpop.f32.mrf.mxu0
  %v1256 = vadd.f32 0.0, %v1255
  %v1257 = vpop.f32.mrf.mxu0
  %v1258 = vpop.f32.mrf.mxu0
  %v1259 = vadd.f32 0.0, %v1258
  %v1260 = vpop.f32.mrf.mxu0
  %1261 = vmatprep.mubr.bf16.mxu0 %v62
  %1262 = vmatmul.mubr.bf16.gmra.mxu0 %v61
  %v1263 = vpop.f32.mrf.mxu0
  %v1264 = vadd.f32 0.0, %v1263
  %v1265 = vpop.f32.mrf.mxu0
  %v1266 = vpop.f32.mrf.mxu0
  %v1267 = vadd.f32 0.0, %v1266
  %v1268 = vpop.f32.mrf.mxu0
  %1269 = vmatprep.mubr.bf16.mxu0 %v64
  %1270 = vmatmul.mubr.bf16.gmra.mxu0 %v63
  %v1271 = vpop.f32.mrf.mxu0
  %v1272 = vadd.f32 0.0, %v1271
  %v1273 = vpop.f32.mrf.mxu0
  %v1274 = vpop.f32.mrf.mxu0
  %v1275 = vadd.f32 0.0, %v1274
  %v1276 = vpop.f32.mrf.mxu0
  %1277 = vmatprep.mubr.bf16.mxu0 %v66
  %1278 = vmatmul.mubr.bf16.gmra.mxu0 %v65
  %v1279 = vpop.f32.mrf.mxu0
  %v1280 = vadd.f32 0.0, %v1279
  %v1281 = vpop.f32.mrf.mxu0
  %v1282 = vpop.f32.mrf.mxu0
  %v1283 = vadd.f32 0.0, %v1282
  %v1284 = vpop.f32.mrf.mxu0
  %1285 = vmatprep.mubr.bf16.mxu0 %v68
  %1286 = vmatmul.mubr.bf16.gmra.mxu0 %v67
  %v1287 = vpop.f32.mrf.mxu0
  %v1288 = vadd.f32 0.0, %v1287
  %v1289 = vpop.f32.mrf.mxu0
  %v1290 = vpop.f32.mrf.mxu0
  %v1291 = vadd.f32 0.0, %v1290
  %v1292 = vpop.f32.mrf.mxu0
  %1293 = vmatprep.mubr.bf16.mxu0 %v70
  %1294 = vmatmul.mubr.bf16.gmra.mxu0 %v69
  %v1295 = vpop.f32.mrf.mxu0
  %v1296 = vadd.f32 0.0, %v1295
  %v1297 = vpop.f32.mrf.mxu0
  %v1298 = vpop.f32.mrf.mxu0
  %v1299 = vadd.f32 0.0, %v1298
  %v1300 = vpop.f32.mrf.mxu0
  %1301 = vmatprep.mubr.bf16.mxu0 %v72
  %1302 = vmatmul.mubr.bf16.gmra.mxu0 %v71
  %v1303 = vpop.f32.mrf.mxu0
  %v1304 = vadd.f32 0.0, %v1303
  %v1305 = vpop.f32.mrf.mxu0
  %v1306 = vpop.f32.mrf.mxu0
  %v1307 = vadd.f32 0.0, %v1306
  %v1308 = vpop.f32.mrf.mxu0
  %1309 = vmatprep.mubr.bf16.mxu0 %v74
  %1310 = vmatmul.mubr.bf16.gmra.mxu0 %v73
  %v1311 = vpop.f32.mrf.mxu0
  %v1312 = vadd.f32 0.0, %v1311
  %v1313 = vpop.f32.mrf.mxu0
  %v1314 = vpop.f32.mrf.mxu0
  %v1315 = vadd.f32 0.0, %v1314
  %v1316 = vpop.f32.mrf.mxu0
  %1317 = vdwg.mxu0
  %v1318 = vmul.f32 %v1192, %v399
  %v1319 = vmul.f32 %v1195, %v404
  %v1320 = vmul.f32 %v1200, %v409
  %v1321 = vmul.f32 %v1203, %v414
  %v1322 = vmul.f32 %v1208, %v419
  %v1323 = vmul.f32 %v1211, %v424
  %v1324 = vmul.f32 %v1216, %v429
  %v1325 = vmul.f32 %v1219, %v434
  %v1326 = vmul.f32 %v1224, %v439
  %v1327 = vmul.f32 %v1227, %v444
  %v1328 = vmul.f32 %v1232, %v449
  %v1329 = vmul.f32 %v1235, %v454
  %v1330 = vmul.f32 %v1240, %v459
  %v1331 = vmul.f32 %v1243, %v464
  %v1332 = vmul.f32 %v1248, %v469
  %v1333 = vmul.f32 %v1251, %v474
  %v1334 = vmul.f32 %v1256, %v479
  %v1335 = vmul.f32 %v1259, %v484
  %v1336 = vmul.f32 %v1264, %v489
  %v1337 = vmul.f32 %v1267, %v494
  %v1338 = vmul.f32 %v1272, %v499
  %v1339 = vmul.f32 %v1275, %v504
  %v1340 = vmul.f32 %v1280, %v509
  %v1341 = vmul.f32 %v1283, %v514
  %v1342 = vmul.f32 %v1288, %v519
  %v1343 = vmul.f32 %v1291, %v524
  %v1344 = vmul.f32 %v1296, %v529
  %v1345 = vmul.f32 %v1299, %v534
  %v1346 = vmul.f32 %v1304, %v539
  %v1347 = vmul.f32 %v1307, %v544
  %v1348 = vmul.f32 %v1312, %v549
  %v1349 = vmul.f32 %v1315, %v554
  %v1350 = vld [vmem:[%s6] sm:$0x1]
  %v1352 = vlaneseq
  %v1353 = vshrl.u32 %v1352, 7
  %v1354 = vsub.s32 0, %v1353
  %v1355 = vrot.slane %v1350, %v1354
  %v1357 = vadd.f32 %v1318, %v1355
  %v1358 = vadd.f32 %v1319, %v1355
  %v1359 = vadd.f32 %v1320, %v1355
  %v1360 = vadd.f32 %v1321, %v1355
  %v1361 = vadd.f32 %v1322, %v1355
  %v1362 = vadd.f32 %v1323, %v1355
  %v1363 = vadd.f32 %v1324, %v1355
  %v1364 = vadd.f32 %v1325, %v1355
  %v1365 = vadd.f32 %v1326, %v1355
  %v1366 = vadd.f32 %v1327, %v1355
  %v1367 = vadd.f32 %v1328, %v1355
  %v1368 = vadd.f32 %v1329, %v1355
  %v1369 = vadd.f32 %v1330, %v1355
  %v1370 = vadd.f32 %v1331, %v1355
  %v1371 = vadd.f32 %v1332, %v1355
  %v1372 = vadd.f32 %v1333, %v1355
  %v1373 = vadd.f32 %v1334, %v1355
  %v1374 = vadd.f32 %v1335, %v1355
  %v1375 = vadd.f32 %v1336, %v1355
  %v1376 = vadd.f32 %v1337, %v1355
  %v1377 = vadd.f32 %v1338, %v1355
  %v1378 = vadd.f32 %v1339, %v1355
  %v1379 = vadd.f32 %v1340, %v1355
  %v1380 = vadd.f32 %v1341, %v1355
  %v1381 = vadd.f32 %v1342, %v1355
  %v1382 = vadd.f32 %v1343, %v1355
  %v1383 = vadd.f32 %v1344, %v1355
  %v1384 = vadd.f32 %v1345, %v1355
  %v1385 = vadd.f32 %v1346, %v1355
  %v1386 = vadd.f32 %v1347, %v1355
  %v1387 = vadd.f32 %v1348, %v1355
  %v1388 = vadd.f32 %v1349, %v1355
  %1389 = vst [vmem:[%s7] sm:$0xff] %v1357
  %1390 = vst [vmem:[%s7 + $0x8] sm:$0xff] %v1358
  %1391 = vst [vmem:[%s7 + $0x10] sm:$0xff] %v1359
  %1392 = vst [vmem:[%s7 + $0x18] sm:$0xff] %v1360
  %1393 = vst [vmem:[%s7 + $0x20] sm:$0xff] %v1361
  %1394 = vst [vmem:[%s7 + $0x28] sm:$0xff] %v1362
  %1395 = vst [vmem:[%s7 + $0x30] sm:$0xff] %v1363
  %1396 = vst [vmem:[%s7 + $0x38] sm:$0xff] %v1364
  %1397 = vst [vmem:[%s7 + $0x40] sm:$0xff] %v1365
  %1398 = vst [vmem:[%s7 + $0x48] sm:$0xff] %v1366
  %1399 = vst [vmem:[%s7 + $0x50] sm:$0xff] %v1367
  %1400 = vst [vmem:[%s7 + $0x58] sm:$0xff] %v1368
  %1401 = vst [vmem:[%s7 + $0x60] sm:$0xff] %v1369
  %1402 = vst [vmem:[%s7 + $0x68] sm:$0xff] %v1370
  %1403 = vst [vmem:[%s7 + $0x70] sm:$0xff] %v1371
  %1404 = vst [vmem:[%s7 + $0x78] sm:$0xff] %v1372
  %1405 = vst [vmem:[%s7 + $0x80] sm:$0xff] %v1373
  %1406 = vst [vmem:[%s7 + $0x88] sm:$0xff] %v1374
  %1407 = vst [vmem:[%s7 + $0x90] sm:$0xff] %v1375
  %1408 = vst [vmem:[%s7 + $0x98] sm:$0xff] %v1376
  %1409 = vst [vmem:[%s7 + $0xa0] sm:$0xff] %v1377
  %1410 = vst [vmem:[%s7 + $0xa8] sm:$0xff] %v1378
  %1411 = vst [vmem:[%s7 + $0xb0] sm:$0xff] %v1379
  %1412 = vst [vmem:[%s7 + $0xb8] sm:$0xff] %v1380
  %1413 = vst [vmem:[%s7 + $0xc0] sm:$0xff] %v1381
  %1414 = vst [vmem:[%s7 + $0xc8] sm:$0xff] %v1382
  %1415 = vst [vmem:[%s7 + $0xd0] sm:$0xff] %v1383
  %1416 = vst [vmem:[%s7 + $0xd8] sm:$0xff] %v1384
  %1417 = vst [vmem:[%s7 + $0xe0] sm:$0xff] %v1385
  %1418 = vst [vmem:[%s7 + $0xe8] sm:$0xff] %v1386
  %1419 = vst [vmem:[%s7 + $0xf0] sm:$0xff] %v1387
  %1420 = vst [vmem:[%s7 + $0xf8] sm:$0xff] %v1388
  // Predicated region
  $region30: #{gcn_forward.1} parent=0 // pred_check
    _
  $region31: #{gcn_forward.1} parent=0 // pred_check_branch
    %1422 = sbr.rel (0) target = $region33
  $region32: #{gcn_forward.1} parent=0 // pred_region
    _
  $region33: #{gcn_forward.1} parent=0 // pred_fallthru
    _
  // Predicated region
  $region34: #{gcn_forward.1} parent=0 // pred_check
    _
  $region35: #{gcn_forward.1} parent=0 // pred_check_branch
    %1424 = sbr.rel (0) target = $region37
  $region36: #{gcn_forward.1} parent=0 // pred_region
    _
  $region37: #{gcn_forward.1} parent=0 // pred_fallthru
    _

</llo_original>
